<compile_context>
chip_gen: v7x
topology: tpu7x:2x2x1
jax: 0.10.0
libtpu: 0.0.40
codegen_flags: <defaults>
</compile_context>

<pallas_src>
import functools

import jax
import jax.numpy as jnp
from jax.experimental import pallas as pl
from jax.experimental.pallas import tpu as pltpu

_NEG_SLOPE = 0.2


def _round_up(n, m):
    return ((n + m - 1) // m) * m


# ----------------------------------------------------------------------------
# Feature probe: is single-buffering of resident blocks (pl.Buffered(1))
# supported by this JAX build?  Probed once with a tiny kernel, cached.
# ----------------------------------------------------------------------------
@functools.lru_cache(maxsize=1)
def _single_buffer_supported():
    try:
        def _probe_kernel(a_ref, b_ref, o_ref):
            o_ref[...] = a_ref[...] + b_ref[...]

        resident = pl.BlockSpec((8, 128), lambda i: (0, 0),
                                pipeline_mode=pl.Buffered(1))
        fn = pl.pallas_call(
            _probe_kernel,
            out_shape=jax.ShapeDtypeStruct((16, 128), jnp.float32),
            grid=(2,),
            in_specs=[resident, pl.BlockSpec((8, 128), lambda i: (i, 0))],
            out_specs=pl.BlockSpec((8, 128), lambda i: (i, 0)),
        )
        jax.jit(fn).lower(jnp.zeros((8, 128), jnp.float32),
                          jnp.zeros((16, 128), jnp.float32)).compile()
        return True
    except Exception:
        return False


# ----------------------------------------------------------------------------
# Kernel body
# ----------------------------------------------------------------------------
def _encoder_kernel(x_ref, w1_ref, b1_ref, w2_ref, b2_ref, wc_ref, bc_ref,
                    out_ref):
    # x_ref: (tb, input_dim) f32.  Weights bf16 [in, out].  Biases f32 [1, out].
    # Cast to bf16 in VMEM (VPU has plenty of slack); MXU accumulates in f32.
    x = x_ref[...].astype(jnp.bfloat16)

    # FC_input + LeakyReLU (f32 VPU math)
    h = jnp.dot(x, w1_ref[...], preferred_element_type=jnp.float32) + b1_ref[...]
    h = jnp.where(h > 0, h, _NEG_SLOPE * h)

    # FC_input2 + LeakyReLU
    h = jnp.dot(h.astype(jnp.bfloat16), w2_ref[...],
                preferred_element_type=jnp.float32) + b2_ref[...]
    h = jnp.where(h > 0, h, _NEG_SLOPE * h)

    # Fused (FC_mean || FC_var) head, written unpadded.
    out_ref[...] = (jnp.dot(h.astype(jnp.bfloat16), wc_ref[...],
                            preferred_element_type=jnp.float32)
                    + bc_ref[...]).astype(out_ref.dtype)


# ----------------------------------------------------------------------------
# One-time weight packing (hoisted out of the forward call).
# ----------------------------------------------------------------------------
def pack_params(params):
    """Fuse the mean/var heads and cast MXU operands to bf16.  Call once."""
    wc = jnp.concatenate([params["wm"], params["wv"]], axis=1)
    bc = jnp.concatenate([params["bm"], params["bv"]], axis=1)
    return dict(
        w1=params["w1"].astype(jnp.bfloat16), b1=params["b1"],
        w2=params["w2"].astype(jnp.bfloat16), b2=params["b2"],
        wc=wc.astype(jnp.bfloat16), bc=bc,
    )


# ----------------------------------------------------------------------------
# Forward wrapper
# ----------------------------------------------------------------------------
def encoder_forward(x, packed, *, block_b=1024):
    """x: [B, input_dim] f32.  packed: output of pack_params.

    Returns (mean, log_var), each [B, latent_dim] f32."""
    return _encoder_forward_jit(x, packed, block_b=block_b,
                                single_buffer=_single_buffer_supported())


@functools.partial(jax.jit, static_argnames=("block_b", "single_buffer"))
def _encoder_forward_jit(x, packed, *, block_b, single_buffer):
    B, input_dim = x.shape
    hidden_dim = packed["w1"].shape[1]
    head_dim = packed["wc"].shape[1]          # 2 * latent_dim
    latent_dim = head_dim // 2

    # --- Batch tile: multiple of 8; >=2 grid steps when possible (v7x). ------
    b8 = _round_up(B, 8)
    if b8 >= 16:
        tb = min(_round_up(block_b, 8), _round_up(pl.cdiv(b8, 2), 8))
    else:
        tb = b8
    b_pad = _round_up(b8, tb)                 # blocks divide the array evenly
    if b_pad != B:
        x = jnp.pad(x, ((0, b_pad - B), (0, 0)))
    grid = (b_pad // tb,)

    w1, b1 = packed["w1"], packed["b1"]
    w2, b2 = packed["w2"], packed["b2"]
    wc, bc = packed["wc"], packed["bc"]

    def _resident(shape):
        # Same block every grid step -> DMA'd once, VMEM-resident.
        if single_buffer:
            return pl.BlockSpec(shape, lambda i: (0, 0),
                                pipeline_mode=pl.Buffered(1))
        return pl.BlockSpec(shape, lambda i: (0, 0))

    # --- Explicit VMEM budget (v5e's default scoped limit is only 16 MiB). ---
    weight_bytes = ((w1.size + w2.size + wc.size) * 2
                    + (b1.size + b2.size + bc.size) * 4)
    tile_bytes = 2 * tb * input_dim * 4 + 2 * tb * head_dim * 4   # dbl-buffered
    vmem_need = tile_bytes + weight_bytes * (1 if single_buffer else 2)
    vmem_limit = int(min(max(32 << 20, 2 * vmem_need), 64 << 20))

    flops = 2 * b_pad * (input_dim * hidden_dim
                         + hidden_dim * hidden_dim
                         + hidden_dim * head_dim)
    bytes_accessed = (b_pad * input_dim * 4      # x read (f32, single pass)
                      + weight_bytes             # resident weights/biases
                      + b_pad * head_dim * 4)    # unpadded f32 output

    out = pl.pallas_call(
        _encoder_kernel,
        out_shape=jax.ShapeDtypeStruct((b_pad, head_dim), jnp.float32),
        grid_spec=pltpu.PrefetchScalarGridSpec(
            num_scalar_prefetch=0,
            grid=grid,
            in_specs=[
                pl.BlockSpec((tb, input_dim), lambda i: (i, 0)),   # x tile
                _resident((input_dim, hidden_dim)),                # w1
                _resident((1, hidden_dim)),                        # b1
                _resident((hidden_dim, hidden_dim)),               # w2
                _resident((1, hidden_dim)),                        # b2
                _resident((hidden_dim, head_dim)),                 # wc = wm|wv
                _resident((1, head_dim)),                          # bc = bm|bv
            ],
            out_specs=pl.BlockSpec((tb, head_dim), lambda i: (i, 0)),
        ),
        compiler_params=pltpu.CompilerParams(
            dimension_semantics=("parallel",),   # batch axis across TCs
            vmem_limit_bytes=vmem_limit,
        ),
        cost_estimate=pl.CostEstimate(
            flops=flops, transcendentals=0, bytes_accessed=bytes_accessed),
    )(x, w1, b1, w2, b2, wc, bc)

    mean = out[:B, :latent_dim]
    log_var = out[:B, latent_dim:head_dim]
    return mean, log_var


# ----------------------------------------------------------------------------
# Init + plain-JAX reference
# ----------------------------------------------------------------------------
def init_params(key, input_dim, hidden_dim, latent_dim):
    """PyTorch nn.Linear-style uniform init.
    Weights stored transposed [in, out]; biases stored as [1, out]."""
    def linear(k, fan_in, fan_out):
        kw, kb = jax.random.split(k)
        bound = 1.0 / jnp.sqrt(fan_in)
        w = jax.random.uniform(kw, (fan_in, fan_out), jnp.float32, -bound, bound)
        b = jax.random.uniform(kb, (1, fan_out), jnp.float32, -bound, bound)
        return w, b

    k1, k2, k3, k4 = jax.random.split(key, 4)
    w1, b1 = linear(k1, input_dim, hidden_dim)
    w2, b2 = linear(k2, hidden_dim, hidden_dim)
    wm, bm = linear(k3, hidden_dim, latent_dim)
    wv, bv = linear(k4, hidden_dim, latent_dim)
    return dict(w1=w1, b1=b1, w2=w2, b2=b2, wm=wm, bm=bm, wv=wv, bv=bv)


def encoder_reference(x, p):
    def lrelu(v):
        return jnp.where(v > 0, v, _NEG_SLOPE * v)
    h = lrelu(x @ p["w1"] + p["b1"])
    h = lrelu(h @ p["w2"] + p["b2"])
    return h @ p["wm"] + p["bm"], h @ p["wv"] + p["bv"]


if __name__ == "__main__":
    # Small shapes consistent with the module: Linear(input -> hidden -> latent).
    batch, input_dim, hidden_dim, latent_dim = 8, 64, 32, 16

    key = jax.random.PRNGKey(0)
    kx, kp = jax.random.split(key)
    x = jax.random.normal(kx, (batch, input_dim), dtype=jnp.float32)
    params = init_params(kp, input_dim, hidden_dim, latent_dim)

    packed = pack_params(params)                 # one-time weight packing
    mean, log_var = encoder_forward(x, packed)
    jax.block_until_ready((mean, log_var))

    # Verify against the plain-JAX f32 reference.  Tolerance is loosened
    # because the kernel feeds the MXU bf16 operands (f32 accumulation).
    mean_ref, log_var_ref = encoder_reference(x, params)
    assert mean.shape == (batch, latent_dim)
    assert log_var.shape == (batch, latent_dim)
    assert jnp.allclose(mean, mean_ref, atol=5e-2, rtol=5e-2), "mean mismatch"
    assert jnp.allclose(log_var, log_var_ref, atol=5e-2, rtol=5e-2), "log_var mismatch"

    print("KERNEL_OK")
</pallas_src>

<mosaic_0001>
module attributes {stable_mosaic.version = 11 : i64} {
  func.func @_encoder_kernel(%arg0: i32, %arg1: memref<8x64xf32, #tpu.memory_space<vmem>>, %arg2: memref<64x32xbf16, #tpu.memory_space<vmem>>, %arg3: memref<1x32xf32, #tpu.memory_space<vmem>>, %arg4: memref<32x32xbf16, #tpu.memory_space<vmem>>, %arg5: memref<1x32xf32, #tpu.memory_space<vmem>>, %arg6: memref<32x32xbf16, #tpu.memory_space<vmem>>, %arg7: memref<1x32xf32, #tpu.memory_space<vmem>>, %arg8: memref<8x32xf32, #tpu.memory_space<vmem>>) attributes {dimension_semantics = [#tpu.dimension_semantics<parallel>], iteration_bounds = array<i64: 1>, scalar_prefetch = 0 : i64, scratch_operands = 0 : i64, tpu.core_type = #tpu.core_type<tc>, window_params = [{transform_indices = @transform_0, window_bounds = array<i64: 8, 64>}, {pipeline_mode = #tpu.pipeline_mode<synchronous>, transform_indices = @transform_1, window_bounds = array<i64: 64, 32>}, {pipeline_mode = #tpu.pipeline_mode<synchronous>, transform_indices = @transform_2, window_bounds = array<i64: 1, 32>}, {pipeline_mode = #tpu.pipeline_mode<synchronous>, transform_indices = @transform_3, window_bounds = array<i64: 32, 32>}, {pipeline_mode = #tpu.pipeline_mode<synchronous>, transform_indices = @transform_4, window_bounds = array<i64: 1, 32>}, {pipeline_mode = #tpu.pipeline_mode<synchronous>, transform_indices = @transform_5, window_bounds = array<i64: 32, 32>}, {pipeline_mode = #tpu.pipeline_mode<synchronous>, transform_indices = @transform_6, window_bounds = array<i64: 1, 32>}, {transform_indices = @transform_7, window_bounds = array<i64: 8, 32>}]} {
    %c0 = arith.constant 0 : index
    %c0_0 = arith.constant 0 : index
    %0 = vector.load %arg1[%c0, %c0_0] : memref<8x64xf32, #tpu.memory_space<vmem>>, vector<8x64xf32>
    %1 = arith.truncf %0 : vector<8x64xf32> to vector<8x64xbf16>
    %c0_1 = arith.constant 0 : index
    %c0_2 = arith.constant 0 : index
    %2 = vector.load %arg2[%c0_1, %c0_2] : memref<64x32xbf16, #tpu.memory_space<vmem>>, vector<64x32xbf16>
    %cst = arith.constant dense<0.000000e+00> : vector<8x32xf32>
    %3 = tpu.matmul %1, %2, %cst {dimension_numbers = #tpu.dot_dimension_numbers<[1], [0], [0], [1], [0, 0, 1, 1], [], []>} : vector<8x64xbf16>, vector<64x32xbf16>, vector<8x32xf32> -> vector<8x32xf32>
    %c0_3 = arith.constant 0 : index
    %c0_4 = arith.constant 0 : index
    %4 = vector.load %arg3[%c0_3, %c0_4] : memref<1x32xf32, #tpu.memory_space<vmem>>, vector<1x32xf32>
    %5 = vector.broadcast %4 : vector<1x32xf32> to vector<8x32xf32>
    %6 = arith.addf %3, %5 : vector<8x32xf32>
    %cst_5 = arith.constant 0.000000e+00 : f32
    %7 = vector.broadcast %cst_5 : f32 to vector<8x32xf32>
    %8 = arith.cmpf ogt, %6, %7 : vector<8x32xf32>
    %cst_6 = arith.constant 2.000000e-01 : f32
    %9 = vector.broadcast %cst_6 : f32 to vector<8x32xf32>
    %10 = arith.mulf %9, %6 : vector<8x32xf32>
    %11 = arith.select %8, %6, %10 : vector<8x32xi1>, vector<8x32xf32>
    %12 = arith.truncf %11 : vector<8x32xf32> to vector<8x32xbf16>
    %c0_7 = arith.constant 0 : index
    %c0_8 = arith.constant 0 : index
    %13 = vector.load %arg4[%c0_7, %c0_8] : memref<32x32xbf16, #tpu.memory_space<vmem>>, vector<32x32xbf16>
    %cst_9 = arith.constant dense<0.000000e+00> : vector<8x32xf32>
    %14 = tpu.matmul %12, %13, %cst_9 {dimension_numbers = #tpu.dot_dimension_numbers<[1], [0], [0], [1], [0, 0, 1, 1], [], []>} : vector<8x32xbf16>, vector<32x32xbf16>, vector<8x32xf32> -> vector<8x32xf32>
    %c0_10 = arith.constant 0 : index
    %c0_11 = arith.constant 0 : index
    %15 = vector.load %arg5[%c0_10, %c0_11] : memref<1x32xf32, #tpu.memory_space<vmem>>, vector<1x32xf32>
    %16 = vector.broadcast %15 : vector<1x32xf32> to vector<8x32xf32>
    %17 = arith.addf %14, %16 : vector<8x32xf32>
    %cst_12 = arith.constant 0.000000e+00 : f32
    %18 = vector.broadcast %cst_12 : f32 to vector<8x32xf32>
    %19 = arith.cmpf ogt, %17, %18 : vector<8x32xf32>
    %cst_13 = arith.constant 2.000000e-01 : f32
    %20 = vector.broadcast %cst_13 : f32 to vector<8x32xf32>
    %21 = arith.mulf %20, %17 : vector<8x32xf32>
    %22 = arith.select %19, %17, %21 : vector<8x32xi1>, vector<8x32xf32>
    %23 = arith.truncf %22 : vector<8x32xf32> to vector<8x32xbf16>
    %c0_14 = arith.constant 0 : index
    %c0_15 = arith.constant 0 : index
    %24 = vector.load %arg6[%c0_14, %c0_15] : memref<32x32xbf16, #tpu.memory_space<vmem>>, vector<32x32xbf16>
    %cst_16 = arith.constant dense<0.000000e+00> : vector<8x32xf32>
    %25 = tpu.matmul %23, %24, %cst_16 {dimension_numbers = #tpu.dot_dimension_numbers<[1], [0], [0], [1], [0, 0, 1, 1], [], []>} : vector<8x32xbf16>, vector<32x32xbf16>, vector<8x32xf32> -> vector<8x32xf32>
    %c0_17 = arith.constant 0 : index
    %c0_18 = arith.constant 0 : index
    %26 = vector.load %arg7[%c0_17, %c0_18] : memref<1x32xf32, #tpu.memory_space<vmem>>, vector<1x32xf32>
    %27 = vector.broadcast %26 : vector<1x32xf32> to vector<8x32xf32>
    %28 = arith.addf %25, %27 : vector<8x32xf32>
    %c0_19 = arith.constant 0 : index
    %c0_20 = arith.constant 0 : index
    %29 = vector.load %arg8[%c0_19, %c0_20] : memref<8x32xf32, #tpu.memory_space<vmem>>, vector<8x32xf32>
    tpu.vector_store %arg8[%c0_19, %c0_20], %28 {strides = array<i32>} : memref<8x32xf32, #tpu.memory_space<vmem>>, vector<8x32xf32>,
    return
  }
  func.func @transform_0(%arg0: i32) -> (i32, i32) {
    %c0_i32 = arith.constant 0 : i32
    %c0_i32_0 = arith.constant 0 : i32
    return %arg0, %c0_i32 : i32, i32
  }
  func.func @transform_1(%arg0: i32) -> (i32, i32) {
    %c0_i32 = arith.constant 0 : i32
    %c0_i32_0 = arith.constant 0 : i32
    %c0_i32_1 = arith.constant 0 : i32
    return %c0_i32, %c0_i32_0 : i32, i32
  }
  func.func @transform_2(%arg0: i32) -> (i32, i32) {
    %c0_i32 = arith.constant 0 : i32
    %c0_i32_0 = arith.constant 0 : i32
    %c0_i32_1 = arith.constant 0 : i32
    return %c0_i32, %c0_i32_0 : i32, i32
  }
  func.func @transform_3(%arg0: i32) -> (i32, i32) {
    %c0_i32 = arith.constant 0 : i32
    %c0_i32_0 = arith.constant 0 : i32
    %c0_i32_1 = arith.constant 0 : i32
    return %c0_i32, %c0_i32_0 : i32, i32
  }
  func.func @transform_4(%arg0: i32) -> (i32, i32) {
    %c0_i32 = arith.constant 0 : i32
    %c0_i32_0 = arith.constant 0 : i32
    %c0_i32_1 = arith.constant 0 : i32
    return %c0_i32, %c0_i32_0 : i32, i32
  }
  func.func @transform_5(%arg0: i32) -> (i32, i32) {
    %c0_i32 = arith.constant 0 : i32
    %c0_i32_0 = arith.constant 0 : i32
    %c0_i32_1 = arith.constant 0 : i32
    return %c0_i32, %c0_i32_0 : i32, i32
  }
  func.func @transform_6(%arg0: i32) -> (i32, i32) {
    %c0_i32 = arith.constant 0 : i32
    %c0_i32_0 = arith.constant 0 : i32
    %c0_i32_1 = arith.constant 0 : i32
    return %c0_i32, %c0_i32_0 : i32, i32
  }
  func.func @transform_7(%arg0: i32) -> (i32, i32) {
    %c0_i32 = arith.constant 0 : i32
    %c0_i32_0 = arith.constant 0 : i32
    return %arg0, %c0_i32 : i32, i32
  }
}

</mosaic_0001>

<llo_original>
// kernel: _encoder_forward_jit.1
$region0: #{_encoder_forward_jit.1}
  #allocation0 [shape = 'u32[]', space=smem, size = 0x4, offset = 0x4, fixed_abs, tag = 'smem constant byte address 0x4 - core index']
  #allocation1 [shape = 'u32[144,128]{1,0:T(1,128)}', space=vmem, size = 0x12000, scoped, tag = 'internal scratch']
  %s0 = inlined_call_operand.vmem [shape: f32[8,64], index: 0, kind: input, shape index: {}]
  %s1 = inlined_call_operand.vmem [shape: bf16[64,32], index: 1, kind: input, shape index: {}]
  %s2 = inlined_call_operand.vmem [shape: f32[1,32], index: 2, kind: input, shape index: {}]
  %s3 = inlined_call_operand.vmem [shape: bf16[32,32], index: 3, kind: input, shape index: {}]
  %s4 = inlined_call_operand.vmem [shape: f32[1,32], index: 4, kind: input, shape index: {}]
  %s5 = inlined_call_operand.vmem [shape: bf16[32,32], index: 5, kind: input, shape index: {}]
  %s6 = inlined_call_operand.vmem [shape: f32[1,32], index: 6, kind: input, shape index: {}]
  %s7 = inlined_call_operand.vmem [shape: f32[8,32], index: 7, kind: output, shape index: {}]
  %s8 = sld [smem:[#allocation0]]
  $region38: #{_encoder_forward_jit.1} parent=0
    _
  %s10 = ssub.s32 1, %s8
  %s11 = scalar_select 0, %s10, %s8
  // Predicated region
  $region2: #{_encoder_forward_jit.1} parent=0 // pred_check
    _
  $region3: #{_encoder_forward_jit.1} parent=0 // pred_check_branch
    %13 = sbr.rel (0) target = $region5
  $region4: #{_encoder_forward_jit.1} parent=0 // pred_region
    _
  $region5: #{_encoder_forward_jit.1} parent=0 // pred_fallthru
    _
  // Predicated region
  $region6: #{_encoder_forward_jit.1} parent=0 // pred_check
    _
  $region7: #{_encoder_forward_jit.1} parent=0 // pred_check_branch
    %15 = sbr.rel (0) target = $region9
  $region8: #{_encoder_forward_jit.1} parent=0 // pred_region
    _
  $region9: #{_encoder_forward_jit.1} parent=0 // pred_fallthru
    _
  // Predicated region
  $region10: #{_encoder_forward_jit.1} parent=0 // pred_check
    _
  $region11: #{_encoder_forward_jit.1} parent=0 // pred_check_branch
    %17 = sbr.rel (0) target = $region13
  $region12: #{_encoder_forward_jit.1} parent=0 // pred_region
    _
  $region13: #{_encoder_forward_jit.1} parent=0 // pred_fallthru
    _
  // Predicated region
  $region14: #{_encoder_forward_jit.1} parent=0 // pred_check
    _
  $region15: #{_encoder_forward_jit.1} parent=0 // pred_check_branch
    %19 = sbr.rel (0) target = $region17
  $region16: #{_encoder_forward_jit.1} parent=0 // pred_region
    _
  $region17: #{_encoder_forward_jit.1} parent=0 // pred_fallthru
    _
  // Predicated region
  $region18: #{_encoder_forward_jit.1} parent=0 // pred_check
    _
  $region19: #{_encoder_forward_jit.1} parent=0 // pred_check_branch
    %21 = sbr.rel (0) target = $region21
  $region20: #{_encoder_forward_jit.1} parent=0 // pred_region
    _
  $region21: #{_encoder_forward_jit.1} parent=0 // pred_fallthru
    _
  // Predicated region
  $region22: #{_encoder_forward_jit.1} parent=0 // pred_check
    _
  $region23: #{_encoder_forward_jit.1} parent=0 // pred_check_branch
    %23 = sbr.rel (0) target = $region25
  $region24: #{_encoder_forward_jit.1} parent=0 // pred_region
    _
  $region25: #{_encoder_forward_jit.1} parent=0 // pred_fallthru
    _
  // Predicated region
  $region26: #{_encoder_forward_jit.1} parent=0 // pred_check
    _
  $region27: #{_encoder_forward_jit.1} parent=0 // pred_check_branch
    %25 = sbr.rel (0) target = $region29
  $region28: #{_encoder_forward_jit.1} parent=0 // pred_region
    _
  $region29: #{_encoder_forward_jit.1} parent=0 // pred_fallthru
    _
  %v27 = vld [vmem:[%s0] sm:$0xff]
  %v28 = vpack.c.bf16 %v27, %v27
  %v29 = vld [vmem:[%s1] sm:$0xf]
  %v30 = vld [vmem:[%s1 + $0x4] sm:$0xf]
  %v31 = vld [vmem:[%s1 + $0x8] sm:$0xf]
  %v32 = vld [vmem:[%s1 + $0xc] sm:$0xf]
  %v33 = vld [vmem:[%s1 + $0x10] sm:$0xf]
  %v34 = vld [vmem:[%s1 + $0x14] sm:$0xf]
  %v35 = vld [vmem:[%s1 + $0x18] sm:$0xf]
  %v36 = vld [vmem:[%s1 + $0x1c] sm:$0xf]
  %v37 = vld [vmem:[%s2] sm:$0x1]
  %v39 = vlaneseq
  %v40 = vshrl.u32 %v39, 7
  %v41 = vsub.s32 0, %v40
  %v42 = vrot.slane %v37, %v41
  %v52 = vunpack.c.l.b16 %v29
  %v53 = vunpack.c.l.b16 %v30
  %v54 = vunpack.c.l.b16 %v31
  %v55 = vunpack.c.l.b16 %v32
  %v56 = vunpack.c.l.b16 %v33
  %v57 = vunpack.c.l.b16 %v34
  %v58 = vunpack.c.l.b16 %v35
  %v59 = vunpack.c.l.b16 %v36
  %v60 = vpack.c.b16 %v53, %v52
  %v61 = vpack.c.b16 %v55, %v54
  %v62 = vpack.c.b16 %v57, %v56
  %v63 = vpack.c.b16 %v59, %v58
  %vm68 = vcmask 523264
  %v70 = vsel %vm68, %v28, 0
  %72 = vmatprep.subr.bf16.mxu0 0
  %73 = vmatpush1.bf16.msra.mxu0 %v60
  %74 = vmatprep.subr.bf16.mxu0 0
  %75 = vmatpush1.bf16.msra.mxu0 %v61
  %76 = vmatprep.subr.bf16.mxu0 0
  %77 = vmatpush1.bf16.msra.mxu0 %v62
  %78 = vmatprep.subr.bf16.mxu0 0
  %79 = vmatpush1.bf16.msra.mxu0 %v63
  %80 = vmatprep.subr.bf16.mxu0 0
  %81 = vmatpush1.bf16.msra.mxu0 0
  %82 = vmatprep.subr.bf16.mxu0 0
  %83 = vmatpush1.bf16.msra.mxu0 0
  %84 = vmatprep.subr.bf16.mxu0 0
  %85 = vmatpush1.bf16.msra.mxu0 0
  %86 = vmatprep.subr.bf16.mxu0 0
  %87 = vmatpush1.bf16.msra.mxu0 0
  %88 = vmatprep.subr.bf16.mxu0 0
  %89 = vmatpush1.bf16.msra.mxu0 0
  %90 = vmatprep.subr.bf16.mxu0 0
  %91 = vmatpush1.bf16.msra.mxu0 0
  %92 = vmatprep.subr.bf16.mxu0 0
  %93 = vmatpush1.bf16.msra.mxu0 0
  %94 = vmatprep.subr.bf16.mxu0 0
  %95 = vmatpush1.bf16.msra.mxu0 0
  %96 = vmatprep.subr.bf16.mxu0 0
  %97 = vmatpush1.bf16.msra.mxu0 0
  %98 = vmatprep.subr.bf16.mxu0 0
  %99 = vmatpush1.bf16.msra.mxu0 0
  %100 = vmatprep.subr.bf16.mxu0 0
  %101 = vmatpush1.bf16.msra.mxu0 0
  %102 = vmatprep.subr.bf16.mxu0 0
  %103 = vmatpush1.bf16.msra.mxu0 0
  %104 = vmatprep.mubr.bf16.mxu0 0
  %105 = vmatmul.mubr.bf16.gmra.mrb[0].mxu0 %v70
  %v106 = vpop.f32.mrb[0].mxu0
  %v107 = vadd.f32 %v42, %v106
  %v108 = vpop.f32.mrb[0].mxu0
  %v109 = vpop.f32.mrb[0].mxu0
  %v110 = vpop.f32.mrb[0].mxu0
  %111 = vdwg.mxu0
  %vm112 = vcmp.gt.f32.partialorder %v107, 0.0
  %v113 = vmul.f32 %v107, 0.2
  %v114 = vsel %vm112, %v107, %v113
  %v115 = vpack.c.bf16 %v114, %v114
  %v116 = vld [vmem:[%s3] sm:$0xf]
  %v117 = vld [vmem:[%s3 + $0x4] sm:$0xf]
  %v118 = vld [vmem:[%s3 + $0x8] sm:$0xf]
  %v119 = vld [vmem:[%s3 + $0xc] sm:$0xf]
  %v120 = vld [vmem:[%s4] sm:$0x1]
  %v122 = vlaneseq
  %v123 = vshrl.u32 %v122, 7
  %v124 = vsub.s32 0, %v123
  %v125 = vrot.slane %v120, %v124
  %v131 = vunpack.c.l.b16 %v116
  %v132 = vunpack.c.l.b16 %v117
  %v133 = vunpack.c.l.b16 %v118
  %v134 = vunpack.c.l.b16 %v119
  %v135 = vpack.c.b16 %v132, %v131
  %v136 = vpack.c.b16 %v134, %v133
  %vm139 = vcmask 261120
  %v141 = vsel %vm139, %v115, 0
  %143 = vmatprep.subr.bf16.mxu0 0
  %144 = vmatpush1.bf16.msra.mxu0 %v135
  %145 = vmatprep.subr.bf16.mxu0 0
  %146 = vmatpush1.bf16.msra.mxu0 %v136
  %147 = vmatprep.subr.bf16.mxu0 0
  %148 = vmatpush1.bf16.msra.mxu0 0
  %149 = vmatprep.subr.bf16.mxu0 0
  %150 = vmatpush1.bf16.msra.mxu0 0
  %151 = vmatprep.subr.bf16.mxu0 0
  %152 = vmatpush1.bf16.msra.mxu0 0
  %153 = vmatprep.subr.bf16.mxu0 0
  %154 = vmatpush1.bf16.msra.mxu0 0
  %155 = vmatprep.subr.bf16.mxu0 0
  %156 = vmatpush1.bf16.msra.mxu0 0
  %157 = vmatprep.subr.bf16.mxu0 0
  %158 = vmatpush1.bf16.msra.mxu0 0
  %159 = vmatprep.subr.bf16.mxu0 0
  %160 = vmatpush1.bf16.msra.mxu0 0
  %161 = vmatprep.subr.bf16.mxu0 0
  %162 = vmatpush1.bf16.msra.mxu0 0
  %163 = vmatprep.subr.bf16.mxu0 0
  %164 = vmatpush1.bf16.msra.mxu0 0
  %165 = vmatprep.subr.bf16.mxu0 0
  %166 = vmatpush1.bf16.msra.mxu0 0
  %167 = vmatprep.subr.bf16.mxu0 0
  %168 = vmatpush1.bf16.msra.mxu0 0
  %169 = vmatprep.subr.bf16.mxu0 0
  %170 = vmatpush1.bf16.msra.mxu0 0
  %171 = vmatprep.subr.bf16.mxu0 0
  %172 = vmatpush1.bf16.msra.mxu0 0
  %173 = vmatprep.subr.bf16.mxu0 0
  %174 = vmatpush1.bf16.msra.mxu0 0
  %175 = vmatprep.mubr.bf16.mxu0 0
  %176 = vmatmul.mubr.bf16.gmra.mrb[0].mxu0 %v141
  %v177 = vpop.f32.mrb[0].mxu0
  %v178 = vadd.f32 %v125, %v177
  %v179 = vpop.f32.mrb[0].mxu0
  %v180 = vpop.f32.mrb[0].mxu0
  %v181 = vpop.f32.mrb[0].mxu0
  %182 = vdwg.mxu0
  %vm183 = vcmp.gt.f32.partialorder %v178, 0.0
  %v184 = vmul.f32 %v178, 0.2
  %v185 = vsel %vm183, %v178, %v184
  %v186 = vpack.c.bf16 %v185, %v185
  %v187 = vld [vmem:[%s5] sm:$0xf]
  %v188 = vld [vmem:[%s5 + $0x4] sm:$0xf]
  %v189 = vld [vmem:[%s5 + $0x8] sm:$0xf]
  %v190 = vld [vmem:[%s5 + $0xc] sm:$0xf]
  %v191 = vld [vmem:[%s6] sm:$0x1]
  %v193 = vlaneseq
  %v194 = vshrl.u32 %v193, 7
  %v195 = vsub.s32 0, %v194
  %v196 = vrot.slane %v191, %v195
  %v202 = vunpack.c.l.b16 %v187
  %v203 = vunpack.c.l.b16 %v188
  %v204 = vunpack.c.l.b16 %v189
  %v205 = vunpack.c.l.b16 %v190
  %v206 = vpack.c.b16 %v203, %v202
  %v207 = vpack.c.b16 %v205, %v204
  %v211 = vsel %vm139, %v186, 0
  %213 = vmatprep.subr.bf16.mxu0 0
  %214 = vmatpush1.bf16.msra.mxu0 %v206
  %215 = vmatprep.subr.bf16.mxu0 0
  %216 = vmatpush1.bf16.msra.mxu0 %v207
  %217 = vmatprep.subr.bf16.mxu0 0
  %218 = vmatpush1.bf16.msra.mxu0 0
  %219 = vmatprep.subr.bf16.mxu0 0
  %220 = vmatpush1.bf16.msra.mxu0 0
  %221 = vmatprep.subr.bf16.mxu0 0
  %222 = vmatpush1.bf16.msra.mxu0 0
  %223 = vmatprep.subr.bf16.mxu0 0
  %224 = vmatpush1.bf16.msra.mxu0 0
  %225 = vmatprep.subr.bf16.mxu0 0
  %226 = vmatpush1.bf16.msra.mxu0 0
  %227 = vmatprep.subr.bf16.mxu0 0
  %228 = vmatpush1.bf16.msra.mxu0 0
  %229 = vmatprep.subr.bf16.mxu0 0
  %230 = vmatpush1.bf16.msra.mxu0 0
  %231 = vmatprep.subr.bf16.mxu0 0
  %232 = vmatpush1.bf16.msra.mxu0 0
  %233 = vmatprep.subr.bf16.mxu0 0
  %234 = vmatpush1.bf16.msra.mxu0 0
  %235 = vmatprep.subr.bf16.mxu0 0
  %236 = vmatpush1.bf16.msra.mxu0 0
  %237 = vmatprep.subr.bf16.mxu0 0
  %238 = vmatpush1.bf16.msra.mxu0 0
  %239 = vmatprep.subr.bf16.mxu0 0
  %240 = vmatpush1.bf16.msra.mxu0 0
  %241 = vmatprep.subr.bf16.mxu0 0
  %242 = vmatpush1.bf16.msra.mxu0 0
  %243 = vmatprep.subr.bf16.mxu0 0
  %244 = vmatpush1.bf16.msra.mxu0 0
  %245 = vmatprep.mubr.bf16.mxu0 0
  %246 = vmatmul.mubr.bf16.gmra.mrb[0].mxu0 %v211
  %v247 = vpop.f32.mrb[0].mxu0
  %v248 = vadd.f32 %v196, %v247
  %v249 = vpop.f32.mrb[0].mxu0
  %v250 = vpop.f32.mrb[0].mxu0
  %v251 = vpop.f32.mrb[0].mxu0
  %252 = vdwg.mxu0
  %253 = vst.msk [vmem:[%s7] sm:$0xff] %vm139, %v248
  // Predicated region
  $region30: #{_encoder_forward_jit.1} parent=0 // pred_check
    _
  $region31: #{_encoder_forward_jit.1} parent=0 // pred_check_branch
    %255 = sbr.rel (0) target = $region33
  $region32: #{_encoder_forward_jit.1} parent=0 // pred_region
    _
  $region33: #{_encoder_forward_jit.1} parent=0 // pred_fallthru
    _
  // Predicated region
  $region34: #{_encoder_forward_jit.1} parent=0 // pred_check
    _
  $region35: #{_encoder_forward_jit.1} parent=0 // pred_check_branch
    %257 = sbr.rel (0) target = $region37
  $region36: #{_encoder_forward_jit.1} parent=0 // pred_region
    _
  $region37: #{_encoder_forward_jit.1} parent=0 // pred_fallthru
    _

</llo_original>
